<compile_context>
chip_gen: v7x
topology: tpu7x:2x2x1
jax: 0.10.0
libtpu: 0.0.40
codegen_flags: <defaults>
</compile_context>

<pallas_src>
import functools

import jax
import jax.numpy as jnp
from jax.experimental import pallas as pl
from jax.experimental.pallas import tpu as pltpu

ALPHA = 0.5
BETA = 0.5

_LANES = 128
_SUBLANES = 8
_BLOCK_ROWS = 1024  # rows of 128 lanes per grid step; sweep 512/1024/2048


def _tversky_sums_kernel(n_valid, x_ref, t_ref, out_ref, tp_acc, sp_acc, st_acc):
    """Accumulates TP / sum(p) / sum(t) partial sums over a 1-D reduction grid.

    x_ref, t_ref : (block_rows, 128) VMEM tiles of logits / targets
    out_ref      : (3,) SMEM  -> [TP, Sp, St] written on the last grid step
    *_acc        : (8, 128) f32 VMEM accumulators (vreg-sized, tile-independent)
    n_valid      : static Python int, number of real (unpadded) elements
    """
    i = pl.program_id(0)
    block_rows = x_ref.shape[0]
    block_elems = block_rows * _LANES
    groups = block_rows // _SUBLANES

    @pl.when(i == 0)
    def _():
        tp_acc[...] = jnp.zeros_like(tp_acc)
        sp_acc[...] = jnp.zeros_like(sp_acc)
        st_acc[...] = jnp.zeros_like(st_acc)

    # Cast in-kernel (inputs may be bf16 / int targets); sigmoid runs on EUP.
    p = jax.nn.sigmoid(x_ref[...].astype(jnp.float32))
    t = t_ref[...].astype(jnp.float32)

    def _accumulate(pv, tv):
        # Reduce the (block_rows, 128) tile to vreg-sized (8, 128) partials.
        # The reshape groups whole (8, 128) vreg tiles (layout preserving) and
        # the axis-0 sum is plain vector adds.
        tp_acc[...] += jnp.sum((pv * tv).reshape(groups, _SUBLANES, _LANES), axis=0)
        sp_acc[...] += jnp.sum(pv.reshape(groups, _SUBLANES, _LANES), axis=0)
        st_acc[...] += jnp.sum(tv.reshape(groups, _SUBLANES, _LANES), axis=0)

    block_end = (i + 1) * block_elems

    @pl.when(block_end <= n_valid)
    def _():
        # Fully in-bounds block: no masking work in the steady state.
        _accumulate(p, t)

    @pl.when(block_end > n_valid)
    def _():
        # Tail block: mask out padded / out-of-bounds elements exactly
        # (independent of pad values; also NaN-safe w.r.t. garbage tails).
        row = jax.lax.broadcasted_iota(jnp.int32, (block_rows, _LANES), 0)
        lane = jax.lax.broadcasted_iota(jnp.int32, (block_rows, _LANES), 1)
        idx = i * block_elems + row * _LANES + lane
        valid = idx < n_valid
        _accumulate(jnp.where(valid, p, 0.0), jnp.where(valid, t, 0.0))

    @pl.when(i == pl.num_programs(0) - 1)
    def _():
        out_ref[0] = jnp.sum(tp_acc[...])
        out_ref[1] = jnp.sum(sp_acc[...])
        out_ref[2] = jnp.sum(st_acc[...])


@functools.partial(jax.jit, static_argnames=("smooth", "alpha", "beta"))
def tversky_loss(inputs, targets, smooth=1.0, alpha=ALPHA, beta=BETA):
    n = inputs.size  # static at trace time
    x = inputs.reshape(-1)
    t = targets.reshape(-1)

    # Layout: (rows, 128) with rows a multiple of 8, so blocks match the
    # TPU (8, 128) vreg tiling.  Pad (full-array copy) only when needed;
    # common segmentation shapes are already multiples of 1024 elements.
    rows = pl.cdiv(n, _LANES)
    rows = pl.cdiv(rows, _SUBLANES) * _SUBLANES
    padded = rows * _LANES
    if padded != n:
        x = jnp.pad(x, (0, padded - n))
        t = jnp.pad(t, (0, padded - n))
    x = x.reshape(rows, _LANES)
    t = t.reshape(rows, _LANES)

    block_rows = min(_BLOCK_ROWS, rows)
    grid = (pl.cdiv(rows, block_rows),)

    kernel = functools.partial(_tversky_sums_kernel, n)

    sums = pl.pallas_call(
        kernel,
        out_shape=jax.ShapeDtypeStruct((3,), jnp.float32),
        grid_spec=pltpu.PrefetchScalarGridSpec(
            num_scalar_prefetch=0,
            grid=grid,
            in_specs=[
                pl.BlockSpec((block_rows, _LANES), lambda i: (i, 0)),
                pl.BlockSpec((block_rows, _LANES), lambda i: (i, 0)),
            ],
            out_specs=pl.BlockSpec(memory_space=pltpu.SMEM),
            scratch_shapes=[
                pltpu.VMEM((_SUBLANES, _LANES), jnp.float32),
                pltpu.VMEM((_SUBLANES, _LANES), jnp.float32),
                pltpu.VMEM((_SUBLANES, _LANES), jnp.float32),
            ],
        ),
        compiler_params=pltpu.CompilerParams(
            dimension_semantics=("arbitrary",),
        ),
    )(x, t)

    tp, sp, st = sums[0], sums[1], sums[2]
    fp = sp - tp  # sum((1 - t) * p)
    fn = st - tp  # sum(t * (1 - p))
    tversky = (tp + smooth) / (tp + alpha * fp + beta * fn + smooth)
    return 1.0 - tversky


def _reference(inputs, targets, smooth=1.0, alpha=ALPHA, beta=BETA):
    p = jax.nn.sigmoid(inputs.astype(jnp.float32)).reshape(-1)
    t = targets.astype(jnp.float32).reshape(-1)
    tp = jnp.sum(p * t)
    fp = jnp.sum((1.0 - t) * p)
    fn = jnp.sum(t * (1.0 - p))
    return 1.0 - (tp + smooth) / (tp + alpha * fp + beta * fn + smooth)


if __name__ == "__main__":
    key = jax.random.PRNGKey(0)
    k1, k2 = jax.random.split(key)

    # NCHW, same shape convention a segmentation head would produce
    x = jax.random.normal(k1, (2, 4, 16, 16), dtype=jnp.float32)
    tgt = (jax.random.uniform(k2, (2, 4, 16, 16)) > 0.5).astype(jnp.float32)

    loss = tversky_loss(x, tgt)
    jax.block_until_ready(loss)

    ref = _reference(x, tgt)
    assert jnp.allclose(loss, ref, atol=1e-5, rtol=1e-5), (loss, ref)

    print("KERNEL_OK")
</pallas_src>

<mosaic_0001>
module attributes {stable_mosaic.version = 11 : i64} {
  func.func @_tversky_sums_kernel(%arg0: i32, %arg1: memref<16x128xf32, #tpu.memory_space<vmem>>, %arg2: memref<16x128xf32, #tpu.memory_space<vmem>>, %arg3: memref<3xf32, #tpu.memory_space<smem>>, %arg4: memref<8x128xf32, #tpu.memory_space<vmem>>, %arg5: memref<8x128xf32, #tpu.memory_space<vmem>>, %arg6: memref<8x128xf32, #tpu.memory_space<vmem>>) attributes {dimension_semantics = [#tpu.dimension_semantics<arbitrary>], iteration_bounds = array<i64: 1>, scalar_prefetch = 0 : i64, scratch_operands = 3 : i64, tpu.core_type = #tpu.core_type<tc>, window_params = [{transform_indices = @transform_0, window_bounds = array<i64: 16, 128>}, {transform_indices = @transform_1, window_bounds = array<i64: 16, 128>}, {transform_indices = @transform_2, window_bounds = array<i64: 3>}]} {
    %c0_i32 = arith.constant 0 : i32
    %0 = arith.cmpi eq, %arg0, %c0_i32 : i32
    %1 = arith.extui %0 : i1 to i32
    %c0_i32_0 = arith.constant 0 : i32
    %2 = arith.cmpi ne, %1, %c0_i32_0 : i32
    scf.if %2 {
      %cst_10 = arith.constant 0.000000e+00 : f32
      %21 = vector.broadcast %cst_10 : f32 to vector<8x128xf32>
      %c0_11 = arith.constant 0 : index
      %c0_12 = arith.constant 0 : index
      %22 = vector.load %arg4[%c0_11, %c0_12] : memref<8x128xf32, #tpu.memory_space<vmem>>, vector<8x128xf32>
      tpu.vector_store %arg4[%c0_11, %c0_12], %21 {strides = array<i32>} : memref<8x128xf32, #tpu.memory_space<vmem>>, vector<8x128xf32>,
      %cst_13 = arith.constant 0.000000e+00 : f32
      %23 = vector.broadcast %cst_13 : f32 to vector<8x128xf32>
      %c0_14 = arith.constant 0 : index
      %c0_15 = arith.constant 0 : index
      %24 = vector.load %arg5[%c0_14, %c0_15] : memref<8x128xf32, #tpu.memory_space<vmem>>, vector<8x128xf32>
      tpu.vector_store %arg5[%c0_14, %c0_15], %23 {strides = array<i32>} : memref<8x128xf32, #tpu.memory_space<vmem>>, vector<8x128xf32>,
      %cst_16 = arith.constant 0.000000e+00 : f32
      %25 = vector.broadcast %cst_16 : f32 to vector<8x128xf32>
      %c0_17 = arith.constant 0 : index
      %c0_18 = arith.constant 0 : index
      %26 = vector.load %arg6[%c0_17, %c0_18] : memref<8x128xf32, #tpu.memory_space<vmem>>, vector<8x128xf32>
      tpu.vector_store %arg6[%c0_17, %c0_18], %25 {strides = array<i32>} : memref<8x128xf32, #tpu.memory_space<vmem>>, vector<8x128xf32>,
    } else {
    }
    %c0 = arith.constant 0 : index
    %c0_1 = arith.constant 0 : index
    %3 = vector.load %arg1[%c0, %c0_1] : memref<16x128xf32, #tpu.memory_space<vmem>>, vector<16x128xf32>
    %4 = arith.negf %3 : vector<16x128xf32>
    %5 = math.exp %4 : vector<16x128xf32>
    %cst = arith.constant 1.000000e+00 : f32
    %6 = vector.broadcast %cst : f32 to vector<16x128xf32>
    %7 = arith.addf %6, %5 : vector<16x128xf32>
    %8 = arith.divf %6, %7 : vector<16x128xf32>
    %c0_2 = arith.constant 0 : index
    %c0_3 = arith.constant 0 : index
    %9 = vector.load %arg2[%c0_2, %c0_3] : memref<16x128xf32, #tpu.memory_space<vmem>>, vector<16x128xf32>
    %c1_i32 = arith.constant 1 : i32
    %10 = arith.addi %arg0, %c1_i32 : i32
    %c2048_i32 = arith.constant 2048 : i32
    %11 = arith.muli %10, %c2048_i32 : i32
    %c2048_i32_4 = arith.constant 2048 : i32
    %12 = arith.cmpi sle, %11, %c2048_i32_4 : i32
    %13 = arith.extui %12 : i1 to i32
    %c0_i32_5 = arith.constant 0 : i32
    %14 = arith.cmpi ne, %13, %c0_i32_5 : i32
    scf.if %14 {
      %c0_10 = arith.constant 0 : index
      %c0_11 = arith.constant 0 : index
      %21 = vector.load %arg4[%c0_10, %c0_11] : memref<8x128xf32, #tpu.memory_space<vmem>>, vector<8x128xf32>
      %22 = arith.mulf %8, %9 : vector<16x128xf32>
      %23 = vector.shape_cast %22 : vector<16x128xf32> to vector<2x8x128xf32>
      %cst_12 = arith.constant dense<0.000000e+00> : vector<8x128xf32>
      %24 = vector.multi_reduction <add>, %23, %cst_12 [0] : vector<2x8x128xf32> to vector<8x128xf32>
      %25 = arith.addf %21, %24 : vector<8x128xf32>
      %c0_13 = arith.constant 0 : index
      %c0_14 = arith.constant 0 : index
      %26 = vector.load %arg4[%c0_13, %c0_14] : memref<8x128xf32, #tpu.memory_space<vmem>>, vector<8x128xf32>
      tpu.vector_store %arg4[%c0_13, %c0_14], %25 {strides = array<i32>} : memref<8x128xf32, #tpu.memory_space<vmem>>, vector<8x128xf32>,
      %c0_15 = arith.constant 0 : index
      %c0_16 = arith.constant 0 : index
      %27 = vector.load %arg5[%c0_15, %c0_16] : memref<8x128xf32, #tpu.memory_space<vmem>>, vector<8x128xf32>
      %28 = vector.shape_cast %8 : vector<16x128xf32> to vector<2x8x128xf32>
      %cst_17 = arith.constant dense<0.000000e+00> : vector<8x128xf32>
      %29 = vector.multi_reduction <add>, %28, %cst_17 [0] : vector<2x8x128xf32> to vector<8x128xf32>
      %30 = arith.addf %27, %29 : vector<8x128xf32>
      %c0_18 = arith.constant 0 : index
      %c0_19 = arith.constant 0 : index
      %31 = vector.load %arg5[%c0_18, %c0_19] : memref<8x128xf32, #tpu.memory_space<vmem>>, vector<8x128xf32>
      tpu.vector_store %arg5[%c0_18, %c0_19], %30 {strides = array<i32>} : memref<8x128xf32, #tpu.memory_space<vmem>>, vector<8x128xf32>,
      %c0_20 = arith.constant 0 : index
      %c0_21 = arith.constant 0 : index
      %32 = vector.load %arg6[%c0_20, %c0_21] : memref<8x128xf32, #tpu.memory_space<vmem>>, vector<8x128xf32>
      %33 = vector.shape_cast %9 : vector<16x128xf32> to vector<2x8x128xf32>
      %cst_22 = arith.constant dense<0.000000e+00> : vector<8x128xf32>
      %34 = vector.multi_reduction <add>, %33, %cst_22 [0] : vector<2x8x128xf32> to vector<8x128xf32>
      %35 = arith.addf %32, %34 : vector<8x128xf32>
      %c0_23 = arith.constant 0 : index
      %c0_24 = arith.constant 0 : index
      %36 = vector.load %arg6[%c0_23, %c0_24] : memref<8x128xf32, #tpu.memory_space<vmem>>, vector<8x128xf32>
      tpu.vector_store %arg6[%c0_23, %c0_24], %35 {strides = array<i32>} : memref<8x128xf32, #tpu.memory_space<vmem>>, vector<8x128xf32>,
    } else {
    }
    %c2048_i32_6 = arith.constant 2048 : i32
    %15 = arith.cmpi sgt, %11, %c2048_i32_6 : i32
    %16 = arith.extui %15 : i1 to i32
    %c0_i32_7 = arith.constant 0 : i32
    %17 = arith.cmpi ne, %16, %c0_i32_7 : i32
    scf.if %17 {
      %21 = tpu.iota {dimensions = array<i32: 0>} : vector<16x128xi32>
      %22 = tpu.iota {dimensions = array<i32: 1>} : vector<16x128xi32>
      %c2048_i32_10 = arith.constant 2048 : i32
      %23 = arith.muli %arg0, %c2048_i32_10 : i32
      %c128_i32 = arith.constant 128 : i32
      %24 = vector.broadcast %c128_i32 : i32 to vector<16x128xi32>
      %25 = arith.muli %21, %24 : vector<16x128xi32>
      %26 = vector.broadcast %23 : i32 to vector<16x128xi32>
      %27 = arith.addi %26, %25 : vector<16x128xi32>
      %28 = arith.addi %27, %22 : vector<16x128xi32>
      %c2048_i32_11 = arith.constant 2048 : i32
      %29 = vector.broadcast %c2048_i32_11 : i32 to vector<16x128xi32>
      %30 = arith.cmpi slt, %28, %29 : vector<16x128xi32>
      %cst_12 = arith.constant 0.000000e+00 : f32
      %31 = vector.broadcast %cst_12 : f32 to vector<16x128xf32>
      %32 = arith.select %30, %8, %31 : vector<16x128xi1>, vector<16x128xf32>
      %cst_13 = arith.constant 0.000000e+00 : f32
      %33 = vector.broadcast %cst_13 : f32 to vector<16x128xf32>
      %34 = arith.select %30, %9, %33 : vector<16x128xi1>, vector<16x128xf32>
      %c0_14 = arith.constant 0 : index
      %c0_15 = arith.constant 0 : index
      %35 = vector.load %arg4[%c0_14, %c0_15] : memref<8x128xf32, #tpu.memory_space<vmem>>, vector<8x128xf32>
      %36 = arith.mulf %32, %34 : vector<16x128xf32>
      %37 = vector.shape_cast %36 : vector<16x128xf32> to vector<2x8x128xf32>
      %cst_16 = arith.constant dense<0.000000e+00> : vector<8x128xf32>
      %38 = vector.multi_reduction <add>, %37, %cst_16 [0] : vector<2x8x128xf32> to vector<8x128xf32>
      %39 = arith.addf %35, %38 : vector<8x128xf32>
      %c0_17 = arith.constant 0 : index
      %c0_18 = arith.constant 0 : index
      %40 = vector.load %arg4[%c0_17, %c0_18] : memref<8x128xf32, #tpu.memory_space<vmem>>, vector<8x128xf32>
      tpu.vector_store %arg4[%c0_17, %c0_18], %39 {strides = array<i32>} : memref<8x128xf32, #tpu.memory_space<vmem>>, vector<8x128xf32>,
      %c0_19 = arith.constant 0 : index
      %c0_20 = arith.constant 0 : index
      %41 = vector.load %arg5[%c0_19, %c0_20] : memref<8x128xf32, #tpu.memory_space<vmem>>, vector<8x128xf32>
      %42 = vector.shape_cast %32 : vector<16x128xf32> to vector<2x8x128xf32>
      %cst_21 = arith.constant dense<0.000000e+00> : vector<8x128xf32>
      %43 = vector.multi_reduction <add>, %42, %cst_21 [0] : vector<2x8x128xf32> to vector<8x128xf32>
      %44 = arith.addf %41, %43 : vector<8x128xf32>
      %c0_22 = arith.constant 0 : index
      %c0_23 = arith.constant 0 : index
      %45 = vector.load %arg5[%c0_22, %c0_23] : memref<8x128xf32, #tpu.memory_space<vmem>>, vector<8x128xf32>
      tpu.vector_store %arg5[%c0_22, %c0_23], %44 {strides = array<i32>} : memref<8x128xf32, #tpu.memory_space<vmem>>, vector<8x128xf32>,
      %c0_24 = arith.constant 0 : index
      %c0_25 = arith.constant 0 : index
      %46 = vector.load %arg6[%c0_24, %c0_25] : memref<8x128xf32, #tpu.memory_space<vmem>>, vector<8x128xf32>
      %47 = vector.shape_cast %34 : vector<16x128xf32> to vector<2x8x128xf32>
      %cst_26 = arith.constant dense<0.000000e+00> : vector<8x128xf32>
      %48 = vector.multi_reduction <add>, %47, %cst_26 [0] : vector<2x8x128xf32> to vector<8x128xf32>
      %49 = arith.addf %46, %48 : vector<8x128xf32>
      %c0_27 = arith.constant 0 : index
      %c0_28 = arith.constant 0 : index
      %50 = vector.load %arg6[%c0_27, %c0_28] : memref<8x128xf32, #tpu.memory_space<vmem>>, vector<8x128xf32>
      tpu.vector_store %arg6[%c0_27, %c0_28], %49 {strides = array<i32>} : memref<8x128xf32, #tpu.memory_space<vmem>>, vector<8x128xf32>,
    } else {
    }
    %c0_i32_8 = arith.constant 0 : i32
    %18 = arith.cmpi eq, %arg0, %c0_i32_8 : i32
    %19 = arith.extui %18 : i1 to i32
    %c0_i32_9 = arith.constant 0 : i32
    %20 = arith.cmpi ne, %19, %c0_i32_9 : i32
    scf.if %20 {
      %c0_10 = arith.constant 0 : index
      %c0_11 = arith.constant 0 : index
      %21 = vector.load %arg4[%c0_10, %c0_11] : memref<8x128xf32, #tpu.memory_space<vmem>>, vector<8x128xf32>
      %22 = vector.shape_cast %21 : vector<8x128xf32> to vector<1x8x128xf32>
      %cst_12 = arith.constant dense<0.000000e+00> : vector<1xf32>
      %23 = vector.multi_reduction <add>, %22, %cst_12 [1, 2] : vector<1x8x128xf32> to vector<1xf32>
      %24 = vector.shape_cast %23 : vector<1xf32> to vector<1x1x1xf32>
      %25 = vector.extract %24[0, 0, 0] : f32 from vector<1x1x1xf32>
      %c0_13 = arith.constant 0 : index
      %26 = memref.load %arg3[%c0_13] : memref<3xf32, #tpu.memory_space<smem>>
      memref.store %25, %arg3[%c0_13] : memref<3xf32, #tpu.memory_space<smem>>
      %c0_14 = arith.constant 0 : index
      %c0_15 = arith.constant 0 : index
      %27 = vector.load %arg5[%c0_14, %c0_15] : memref<8x128xf32, #tpu.memory_space<vmem>>, vector<8x128xf32>
      %28 = vector.shape_cast %27 : vector<8x128xf32> to vector<1x8x128xf32>
      %cst_16 = arith.constant dense<0.000000e+00> : vector<1xf32>
      %29 = vector.multi_reduction <add>, %28, %cst_16 [1, 2] : vector<1x8x128xf32> to vector<1xf32>
      %30 = vector.shape_cast %29 : vector<1xf32> to vector<1x1x1xf32>
      %31 = vector.extract %30[0, 0, 0] : f32 from vector<1x1x1xf32>
      %c1 = arith.constant 1 : index
      %32 = memref.load %arg3[%c1] : memref<3xf32, #tpu.memory_space<smem>>
      memref.store %31, %arg3[%c1] : memref<3xf32, #tpu.memory_space<smem>>
      %c0_17 = arith.constant 0 : index
      %c0_18 = arith.constant 0 : index
      %33 = vector.load %arg6[%c0_17, %c0_18] : memref<8x128xf32, #tpu.memory_space<vmem>>, vector<8x128xf32>
      %34 = vector.shape_cast %33 : vector<8x128xf32> to vector<1x8x128xf32>
      %cst_19 = arith.constant dense<0.000000e+00> : vector<1xf32>
      %35 = vector.multi_reduction <add>, %34, %cst_19 [1, 2] : vector<1x8x128xf32> to vector<1xf32>
      %36 = vector.shape_cast %35 : vector<1xf32> to vector<1x1x1xf32>
      %37 = vector.extract %36[0, 0, 0] : f32 from vector<1x1x1xf32>
      %c2 = arith.constant 2 : index
      %38 = memref.load %arg3[%c2] : memref<3xf32, #tpu.memory_space<smem>>
      memref.store %37, %arg3[%c2] : memref<3xf32, #tpu.memory_space<smem>>
    } else {
    }
    return
  }
  func.func @transform_0(%arg0: i32) -> (i32, i32) {
    %c0_i32 = arith.constant 0 : i32
    %c0_i32_0 = arith.constant 0 : i32
    return %arg0, %c0_i32 : i32, i32
  }
  func.func @transform_1(%arg0: i32) -> (i32, i32) {
    %c0_i32 = arith.constant 0 : i32
    %c0_i32_0 = arith.constant 0 : i32
    return %arg0, %c0_i32 : i32, i32
  }
  func.func @transform_2(%arg0: i32) -> i32 {
    %c0_i32 = arith.constant 0 : i32
    %c0_i32_0 = arith.constant 0 : i32
    return %c0_i32 : i32
  }
}

</mosaic_0001>

<llo_original>
// kernel: tversky_loss.1
$region0: #{tversky_loss.1}
  #allocation0 [shape = 'u32[]', space=smem, size = 0x4, offset = 0x4, fixed_abs, tag = 'smem constant byte address 0x4 - core index']
  #allocation1 [shape = 'u32[144,128]{1,0:T(1,128)}', space=vmem, size = 0x12000, scoped, tag = 'internal scratch']
  #allocation2 [shape = 'f32[8,128]{1,0:T(8,128)}', space=vmem, size = 0x1000, scoped, tag = 'scratch operand']
  #allocation3 [shape = 'f32[8,128]{1,0:T(8,128)}', space=vmem, size = 0x1000, scoped, tag = 'scratch operand']
  #allocation4 [shape = 'f32[8,128]{1,0:T(8,128)}', space=vmem, size = 0x1000, scoped, tag = 'scratch operand']
  %s0 = inlined_call_operand.vmem [shape: f32[16,128], index: 0, kind: input, shape index: {}]
  %s1 = inlined_call_operand.vmem [shape: f32[16,128], index: 1, kind: input, shape index: {}]
  %s2 = inlined_call_operand.vmem [shape: f32[3], index: 2, kind: output, shape index: {}]
  %s3 = sld [smem:[#allocation0]]
  $region34: #{tversky_loss.1} parent=0
    _
  %s5 = ssub.s32 1, %s3
  %s6 = scalar_select 0, %s5, %s3
  $region1: #{tversky_loss.1} parent=0
    #allocation5 [shape = 'u8[512]{0}', space=smem, size = 0x200, scoped, tag = 'output window, operand 0, single buffered']
    #allocation6 [shape = 's32[1]{0}', space=sflag, size = 0x4, scoped, tag = 'scoped memory for tversky_loss.1']
    %7 = vsyncpa [#allocation6], 0
    // Predicated region
    $region2: #{tversky_loss.1} parent=1 // pred_check
      _
    $region3: #{tversky_loss.1} parent=1 // pred_check_branch
      %9 = sbr.rel (0) target = $region5
    $region4: #{tversky_loss.1} parent=1 // pred_region
      _
    $region5: #{tversky_loss.1} parent=1 // pred_fallthru
      _
    // Predicated region
    $region6: #{tversky_loss.1} parent=1 // pred_check
      _
    $region7: #{tversky_loss.1} parent=1 // pred_check_branch
      %11 = sbr.rel (0) target = $region9
    $region8: #{tversky_loss.1} parent=1 // pred_region
      _
    $region9: #{tversky_loss.1} parent=1 // pred_fallthru
      _
    %p12 = scmp.eq.s32.totalorder 0, 0
    // Predicated region
    $region10: #{tversky_loss.1} parent=1 // pred_check
      %p13 = pneg %p12
    $region11: #{tversky_loss.1} parent=1 // pred_check_branch
      %15 = sbr.rel (%p13) target = $region13
    $region12: #{tversky_loss.1} parent=1 // pred_region
      %16 = vst [vmem:[#allocation2] sm:$0xff] 0.0
      %17 = vst [vmem:[#allocation3] sm:$0xff] 0.0
      %18 = vst [vmem:[#allocation4] sm:$0xff] 0.0
    $region13: #{tversky_loss.1} parent=1 // pred_fallthru
      _
    %v19 = vld [vmem:[%s0] sm:$0xff]
    %v20 = vld [vmem:[%s0 + $0x8] sm:$0xff]
    %v21 = vxor.u32 %v19, 2147483648
    %v22 = vxor.u32 %v20, 2147483648
    %v23 = vmul.f32 %v21, 1.442695
    %v24 = vpow.pop %v23
    %v25 = vmul.f32 %v22, 1.442695
    %v26 = vpow.pop %v25
    %v27 = vadd.f32 %v24, 1.0
    %v28 = vadd.f32 %v26, 1.0
    %v29 = vrcp.pop %v27
    %v30 = vmul.f32 1.0, %v29
    %v31 = vrcp.pop %v28
    %v32 = vmul.f32 1.0, %v31
    %v33 = vld [vmem:[%s1] sm:$0xff]
    %v34 = vld [vmem:[%s1 + $0x8] sm:$0xff]
    %s35 = sadd.s32 0, 1
    %s36 = smul.u32 %s35, 2048
    %p37 = scmp.le.s32.totalorder %s36, 2048
    // Predicated region
    $region14: #{tversky_loss.1} parent=1 // pred_check
      %p38 = pneg %p37
    $region15: #{tversky_loss.1} parent=1 // pred_check_branch
      %40 = sbr.rel (%p38) target = $region17
    $region16: #{tversky_loss.1} parent=1 // pred_region
      %v41 = vld [vmem:[#allocation2] sm:$0xff]
      %v42 = vmul.f32 %v30, %v33
      %v43 = vmul.f32 %v32, %v34
      %v44 = vadd.f32 %v42, %v43
      %v45 = vadd.f32 %v41, %v44
      %46 = vst [vmem:[#allocation2] sm:$0xff] %v45
      %v47 = vld [vmem:[#allocation3] sm:$0xff]
      %v48 = vadd.f32 %v30, %v32
      %v49 = vadd.f32 %v47, %v48
      %50 = vst [vmem:[#allocation3] sm:$0xff] %v49
      %v51 = vld [vmem:[#allocation4] sm:$0xff]
      %v52 = vadd.f32 %v33, %v34
      %v53 = vadd.f32 %v51, %v52
      %54 = vst [vmem:[#allocation4] sm:$0xff] %v53
    $region17: #{tversky_loss.1} parent=1 // pred_fallthru
      _
    %p55 = scmp.gt.s32.totalorder %s36, 2048
    // Predicated region
    $region18: #{tversky_loss.1} parent=1 // pred_check
      %p56 = pneg %p55
    $region19: #{tversky_loss.1} parent=1 // pred_check_branch
      %58 = sbr.rel (%p56) target = $region21
    $region20: #{tversky_loss.1} parent=1 // pred_region
      %v59 = vlaneseq
      %v60 = vshrl.u32 %v59, 7
      %v61 = vadd.s32 %v60, 8
      %v62 = vlaneseq
      %v63 = vand.u32 %v62, 127
      %s64 = smul.u32 0, 2048
      %v65 = vmul.u32 %v60, 128
      %v66 = vmul.u32 %v61, 128
      %v67 = vstv %s64
      %v68 = vadd.s32 %v67, %v65
      %v69 = vadd.s32 %v67, %v66
      %v70 = vadd.s32 %v68, %v63
      %v71 = vadd.s32 %v69, %v63
      %vm72 = vcmp.lt.s32.totalorder %v70, 2048
      %vm73 = vcmp.lt.s32.totalorder %v71, 2048
      %v74 = vsel %vm72, %v30, 0.0
      %v75 = vsel %vm73, %v32, 0.0
      %v76 = vsel %vm72, %v33, 0.0
      %v77 = vsel %vm73, %v34, 0.0
      %v78 = vld [vmem:[#allocation2] sm:$0xff]
      %v79 = vmul.f32 %v74, %v76
      %v80 = vmul.f32 %v75, %v77
      %v81 = vadd.f32 %v79, %v80
      %v82 = vadd.f32 %v78, %v81
      %83 = vst [vmem:[#allocation2] sm:$0xff] %v82
      %v84 = vld [vmem:[#allocation3] sm:$0xff]
      %v85 = vadd.f32 %v74, %v75
      %v86 = vadd.f32 %v84, %v85
      %87 = vst [vmem:[#allocation3] sm:$0xff] %v86
      %v88 = vld [vmem:[#allocation4] sm:$0xff]
      %v89 = vadd.f32 %v76, %v77
      %v90 = vadd.f32 %v88, %v89
      %91 = vst [vmem:[#allocation4] sm:$0xff] %v90
    $region21: #{tversky_loss.1} parent=1 // pred_fallthru
      _
    // Predicated region
    $region22: #{tversky_loss.1} parent=1 // pred_check
      %p92 = pneg %p12
    $region23: #{tversky_loss.1} parent=1 // pred_check_branch
      %94 = sbr.rel (%p92) target = $region25
    $region24: #{tversky_loss.1} parent=1 // pred_region
      %v95 = vld [vmem:[#allocation2] sm:$0xff]
      %96 = vadd.xlane.f32.xlu0 %v95
      %v97 = vpop.xlane.xlu0 %96
      %v98 = vrot.slane %v97, 4
      %v99 = vadd.f32 %v97, %v98
      %v100 = vrot.slane %v99, 2
      %v101 = vadd.f32 %v99, %v100
      %v102 = vrot.slane %v101, 1
      %v103 = vadd.f32 %v101, %v102
      %s104 = vtos %v103
      %s105 = scalar_lea.smem [#allocation5], 0
      %106 = sst [smem:[%s105]] %s104
      %v107 = vld [vmem:[#allocation3] sm:$0xff]
      %108 = vadd.xlane.f32.xlu0 %v107
      %v109 = vpop.xlane.xlu0 %108
      %v110 = vrot.slane %v109, 4
      %v111 = vadd.f32 %v109, %v110
      %v112 = vrot.slane %v111, 2
      %v113 = vadd.f32 %v111, %v112
      %v114 = vrot.slane %v113, 1
      %v115 = vadd.f32 %v113, %v114
      %s116 = vtos %v115
      %s117 = scalar_lea.smem [#allocation5], 1
      %118 = sst [smem:[%s117]] %s116
      %v119 = vld [vmem:[#allocation4] sm:$0xff]
      %120 = vadd.xlane.f32.xlu0 %v119
      %v121 = vpop.xlane.xlu0 %120
      %v122 = vrot.slane %v121, 4
      %v123 = vadd.f32 %v121, %v122
      %v124 = vrot.slane %v123, 2
      %v125 = vadd.f32 %v123, %v124
      %v126 = vrot.slane %v125, 1
      %v127 = vadd.f32 %v125, %v126
      %s128 = vtos %v127
      %s129 = scalar_lea.smem [#allocation5], 2
      %130 = sst [smem:[%s129]] %s128
    $region25: #{tversky_loss.1} parent=1 // pred_fallthru
      _
    // Predicated region
    $region26: #{tversky_loss.1} parent=1 // pred_check
      _
    $region27: #{tversky_loss.1} parent=1 // pred_check_branch
      %132 = sbr.rel (0) target = $region29
    $region28: #{tversky_loss.1} parent=1 // pred_region
      %s134 = ssub.s32 16, 16
      %135 = vsyncadd [#allocation6], %s134
      %s137 = sshll.u32 %s2, 4
      %s138 = int_to_ptr.vmem [resolvable:$true] %s137
      %140 = dma.smem_to_vmem [#allocation5], 16, %s138, [#allocation6]
    $region29: #{tversky_loss.1} parent=1 // pred_fallthru
      _
    // Predicated region
    $region30: #{tversky_loss.1} parent=1 // pred_check
      _
    $region31: #{tversky_loss.1} parent=1 // pred_check_branch
      %142 = sbr.rel (0) target = $region33
    $region32: #{tversky_loss.1} parent=1 // pred_region
      %143 = dma.done [#allocation6], 16
    $region33: #{tversky_loss.1} parent=1 // pred_fallthru
      _
    %144 = sfence
    %145 = vsyncpa [#allocation6], 1

</llo_original>
